<compile_context>
chip_gen: v7x
topology: tpu7x:2x2x1
jax: 0.10.0
libtpu: 0.0.40
codegen_flags: <defaults>
</compile_context>

<pallas_src>
import functools
from typing import NamedTuple

import jax
import jax.numpy as jnp
from jax.experimental import pallas as pl
from jax.experimental.pallas import tpu as pltpu


def _round_up(a: int, b: int) -> int:
    return (a + b - 1) // b * b


@functools.lru_cache(maxsize=None)
def _vmem_cap_bytes() -> int:
    """Per-core VMEM budget: ~87.5% of physical capacity, conservative fallback = 64 MiB (v7x/TC)."""
    try:
        cap = int(pltpu.get_tpu_info().vmem_capacity_bytes)
    except Exception:
        cap = 64 << 20
    return (cap * 7) // 8


def residual_block_kernel(x_ref, w1_ref, w2_ref, t_ref, o_ref):
    x = x_ref[...]                                    # [TILE_N, Dp], input dtype
    t = t_ref[...]                                    # [2, Dp] f32 shifts (bias + BN folded)

    # linear1 (BN1 scale already folded into W1') + shift + ReLU.  bf16 MXU, f32 accumulate.
    h = jnp.dot(x.astype(jnp.bfloat16), w1_ref[...],
                preferred_element_type=jnp.float32)
    h = jnp.maximum(h + t[0:1, :], 0.0)
    # dropout1: identity in eval mode

    # linear2 (BN2 scale folded into W2') + shift
    h = jnp.dot(h.astype(jnp.bfloat16), w2_ref[...],
                preferred_element_type=jnp.float32)
    h = h + t[1:2, :]

    # residual add (projection is None since in_dim == out_dim) + ReLU
    o_ref[...] = jnp.maximum(h + x.astype(jnp.float32), 0.0).astype(o_ref.dtype)
    # dropout2: identity in eval mode


class ResidualBlockParams(NamedTuple):
    w1: jax.Array    # [Dp, Dp] bf16, BN1 scale folded, zero-padded
    w2: jax.Array    # [Dp, Dp] bf16, BN2 scale folded, zero-padded
    t: jax.Array     # [2, Dp] f32, per-layer shift (bias + BN), zero-padded
    d: int           # original feature dim


def fold_residual_block_params(w1, b1, w2, b2,
                               bn1_gamma, bn1_beta, bn1_mean, bn1_var,
                               bn2_gamma, bn2_beta, bn2_mean, bn2_var,
                               eps=1e-5) -> ResidualBlockParams:
    """One-time prep, hoisted out of the per-call path: fold eval-mode BN + bias, pad the
    feature dim to a lane-dense multiple of 128, cast weights to bf16 (fold done in f32)."""
    D = w1.shape[0]
    assert w1.shape == (D, D) and w2.shape == (D, D), "in_dim must equal out_dim"

    s1 = (bn1_gamma / jnp.sqrt(bn1_var + eps)).astype(jnp.float32)
    t1 = (b1 * s1 + bn1_beta - bn1_mean * s1).astype(jnp.float32)
    s2 = (bn2_gamma / jnp.sqrt(bn2_var + eps)).astype(jnp.float32)
    t2 = (b2 * s2 + bn2_beta - bn2_mean * s2).astype(jnp.float32)

    w1f = w1.astype(jnp.float32) * s1[None, :]        # fold in f32, then cast
    w2f = w2.astype(jnp.float32) * s2[None, :]

    Dp = _round_up(D, 128)
    if Dp == D:
        w1p = w1f.astype(jnp.bfloat16)
        w2p = w2f.astype(jnp.bfloat16)
        t = jnp.stack([t1, t2])
    else:
        w1p = jnp.zeros((Dp, Dp), jnp.bfloat16).at[:D, :D].set(w1f.astype(jnp.bfloat16))
        w2p = jnp.zeros((Dp, Dp), jnp.bfloat16).at[:D, :D].set(w2f.astype(jnp.bfloat16))
        t = jnp.zeros((2, Dp), jnp.float32).at[:, :D].set(jnp.stack([t1, t2]))
    return ResidualBlockParams(w1p, w2p, t, D)


def _call(xp, params: ResidualBlockParams, *, tile_n, grid, single_buffer_resident):
    N, Dp = xp.shape
    x_bytes = jnp.dtype(xp.dtype).itemsize

    tile_spec = pl.BlockSpec((tile_n, Dp), lambda i: (i, 0))          # x / out tiles
    if single_buffer_resident:
        # Constant index_map -> nothing to prefetch; single-buffer to halve resident VMEM.
        w_spec = pl.BlockSpec((Dp, Dp), lambda i: (0, 0), pipeline_mode=pl.Buffered(1))
        t_spec = pl.BlockSpec((2, Dp), lambda i: (0, 0), pipeline_mode=pl.Buffered(1))
        wbuf = 1
    else:
        w_spec = pl.BlockSpec((Dp, Dp), lambda i: (0, 0))
        t_spec = pl.BlockSpec((2, Dp), lambda i: (0, 0))
        wbuf = 2

    # Per-core VMEM budget (megacore: each TensorCore keeps its own resident weight copy).
    vmem_need = (2 * wbuf * Dp * Dp * 2               # resident bf16 weights
                 + wbuf * 8 * Dp * 4                  # (2, Dp) shifts, sublane-padded
                 + 2 * tile_n * Dp * x_bytes          # double-buffered x tiles
                 + 2 * tile_n * Dp * x_bytes          # double-buffered out tiles
                 + (4 << 20))                         # compiler/internal scratch slack
    vmem_limit = min(max(vmem_need, 16 << 20), _vmem_cap_bytes())

    cost = pl.CostEstimate(
        flops=4 * N * Dp * Dp,                        # two (N, Dp) x (Dp, Dp) matmuls
        bytes_accessed=2 * N * Dp * x_bytes + 2 * Dp * Dp * 2 + 2 * Dp * 4,
        transcendentals=0)

    return pl.pallas_call(
        residual_block_kernel,
        out_shape=jax.ShapeDtypeStruct((N, Dp), xp.dtype),
        grid=grid,
        in_specs=[tile_spec, w_spec, w_spec, t_spec],
        out_specs=tile_spec,
        compiler_params=pltpu.CompilerParams(
            dimension_semantics=("parallel",),        # shard batch tiles across v7x TCs
            vmem_limit_bytes=vmem_limit),
        cost_estimate=cost,
    )(xp, params.w1, params.w2, params.t)


def residual_block_apply(x, params: ResidualBlockParams):
    """Per-call path: zero wrapper HBM passes when D % 128 == 0, else one fused pad pass."""
    N, D = x.shape
    assert D == params.d
    Dp = params.w1.shape[0]

    xp = x if Dp == D else jnp.zeros((N, Dp), x.dtype).at[:, :D].set(x)

    # Batch tiling: ragged last block handled by Pallas -> no batch-padding pass / wasted rows.
    tile_n = min(1024 if Dp <= 1024 else 512, _round_up(N, 8))
    grid = (pl.cdiv(N, tile_n),)

    try:
        out = jax.block_until_ready(
            _call(xp, params, tile_n=tile_n, grid=grid, single_buffer_resident=True))
    except Exception:
        # Fallback for jax versions whose TPU lowering rejects pl.Buffered(1).
        out = _call(xp, params, tile_n=tile_n, grid=grid, single_buffer_resident=False)

    return out if Dp == D else out[:, :D]


def residual_block(x, w1, b1, w2, b2,
                   bn1_gamma, bn1_beta, bn1_mean, bn1_var,
                   bn2_gamma, bn2_beta, bn2_mean, bn2_var, eps=1e-5):
    params = fold_residual_block_params(w1, b1, w2, b2,
                                        bn1_gamma, bn1_beta, bn1_mean, bn1_var,
                                        bn2_gamma, bn2_beta, bn2_mean, bn2_var, eps)
    return residual_block_apply(x, params)


def _reference(x, w1, b1, w2, b2, g1, be1, m1, v1, g2, be2, m2, v2, eps=1e-5):
    h = x @ w1 + b1
    h = (h - m1) / jnp.sqrt(v1 + eps) * g1 + be1
    h = jnp.maximum(h, 0.0)
    h = h @ w2 + b2
    h = (h - m2) / jnp.sqrt(v2 + eps) * g2 + be2
    return jnp.maximum(h + x, 0.0)


if __name__ == "__main__":
    key = jax.random.PRNGKey(0)

    # Two small configs: (8, 32) exercises the lane-padding path; (12, 128) the zero-copy
    # fast path (D % 128 == 0) with a ragged batch tile (N not a multiple of 8).
    for (N, D) in [(8, 32), (12, 128)]:
        keys = jax.random.split(jax.random.fold_in(key, D), 9)
        bound = 1.0 / jnp.sqrt(jnp.float32(D))
        x = jax.random.normal(keys[0], (N, D), dtype=jnp.float32)
        w1 = jax.random.uniform(keys[1], (D, D), minval=-bound, maxval=bound)
        b1 = jax.random.uniform(keys[2], (D,), minval=-bound, maxval=bound)
        w2 = jax.random.uniform(keys[3], (D, D), minval=-bound, maxval=bound)
        b2 = jax.random.uniform(keys[4], (D,), minval=-bound, maxval=bound)

        bn1_gamma = 1.0 + 0.1 * jax.random.normal(keys[5], (D,))
        bn1_beta = 0.1 * jax.random.normal(keys[6], (D,))
        bn1_mean = 0.05 * jnp.arange(D, dtype=jnp.float32)
        bn1_var = jnp.ones((D,), jnp.float32) * 1.5

        bn2_gamma = 1.0 + 0.1 * jax.random.normal(keys[7], (D,))
        bn2_beta = 0.1 * jax.random.normal(keys[8], (D,))
        bn2_mean = jnp.zeros((D,), jnp.float32)
        bn2_var = jnp.ones((D,), jnp.float32) * 0.8

        params = fold_residual_block_params(w1, b1, w2, b2,
                                            bn1_gamma, bn1_beta, bn1_mean, bn1_var,
                                            bn2_gamma, bn2_beta, bn2_mean, bn2_var)
        out = jax.block_until_ready(residual_block_apply(x, params))

        ref = _reference(x, w1, b1, w2, b2,
                         bn1_gamma, bn1_beta, bn1_mean, bn1_var,
                         bn2_gamma, bn2_beta, bn2_mean, bn2_var)
        assert out.shape == (N, D)
        # bf16 MXU operands (f32 accumulation) -> loosened tolerance vs f32 reference.
        assert jnp.allclose(out, ref, atol=3e-2, rtol=3e-2), f"mismatch vs reference at D={D}"

    print("KERNEL_OK")
</pallas_src>

<mosaic_0001>
module attributes {stable_mosaic.version = 11 : i64} {
  func.func @residual_block_kernel(%arg0: i32, %arg1: memref<8x128xf32, #tpu.memory_space<vmem>>, %arg2: memref<128x128xbf16, #tpu.memory_space<vmem>>, %arg3: memref<128x128xbf16, #tpu.memory_space<vmem>>, %arg4: memref<2x128xf32, #tpu.memory_space<vmem>>, %arg5: memref<8x128xf32, #tpu.memory_space<vmem>>) attributes {dimension_semantics = [#tpu.dimension_semantics<parallel>], iteration_bounds = array<i64: 1>, scalar_prefetch = 0 : i64, scratch_operands = 0 : i64, tpu.core_type = #tpu.core_type<tc>, window_params = [{transform_indices = @transform_0, window_bounds = array<i64: 8, 128>}, {pipeline_mode = #tpu.pipeline_mode<synchronous>, transform_indices = @transform_1, window_bounds = array<i64: 128, 128>}, {pipeline_mode = #tpu.pipeline_mode<synchronous>, transform_indices = @transform_2, window_bounds = array<i64: 128, 128>}, {pipeline_mode = #tpu.pipeline_mode<synchronous>, transform_indices = @transform_3, window_bounds = array<i64: 2, 128>}, {transform_indices = @transform_4, window_bounds = array<i64: 8, 128>}]} {
    %c0 = arith.constant 0 : index
    %c0_0 = arith.constant 0 : index
    %0 = vector.load %arg1[%c0, %c0_0] : memref<8x128xf32, #tpu.memory_space<vmem>>, vector<8x128xf32>
    %c0_1 = arith.constant 0 : index
    %c0_2 = arith.constant 0 : index
    %1 = vector.load %arg4[%c0_1, %c0_2] : memref<2x128xf32, #tpu.memory_space<vmem>>, vector<2x128xf32>
    %2 = arith.truncf %0 : vector<8x128xf32> to vector<8x128xbf16>
    %c0_3 = arith.constant 0 : index
    %c0_4 = arith.constant 0 : index
    %3 = vector.load %arg2[%c0_3, %c0_4] : memref<128x128xbf16, #tpu.memory_space<vmem>>, vector<128x128xbf16>
    %cst = arith.constant dense<0.000000e+00> : vector<8x128xf32>
    %4 = tpu.matmul %2, %3, %cst {dimension_numbers = #tpu.dot_dimension_numbers<[1], [0], [0], [1], [0, 0, 1, 1], [], []>} : vector<8x128xbf16>, vector<128x128xbf16>, vector<8x128xf32> -> vector<8x128xf32>
    %5 = vector.extract_strided_slice %1 {offsets = [0, 0], sizes = [1, 128], strides = [1, 1]} : vector<2x128xf32> to vector<1x128xf32>
    %6 = vector.broadcast %5 : vector<1x128xf32> to vector<8x128xf32>
    %7 = arith.addf %4, %6 : vector<8x128xf32>
    %cst_5 = arith.constant 0.000000e+00 : f32
    %8 = vector.broadcast %cst_5 : f32 to vector<8x128xf32>
    %9 = arith.maximumf %7, %8 : vector<8x128xf32>
    %10 = arith.truncf %9 : vector<8x128xf32> to vector<8x128xbf16>
    %c0_6 = arith.constant 0 : index
    %c0_7 = arith.constant 0 : index
    %11 = vector.load %arg3[%c0_6, %c0_7] : memref<128x128xbf16, #tpu.memory_space<vmem>>, vector<128x128xbf16>
    %cst_8 = arith.constant dense<0.000000e+00> : vector<8x128xf32>
    %12 = tpu.matmul %10, %11, %cst_8 {dimension_numbers = #tpu.dot_dimension_numbers<[1], [0], [0], [1], [0, 0, 1, 1], [], []>} : vector<8x128xbf16>, vector<128x128xbf16>, vector<8x128xf32> -> vector<8x128xf32>
    %13 = vector.extract_strided_slice %1 {offsets = [1, 0], sizes = [1, 128], strides = [1, 1]} : vector<2x128xf32> to vector<1x128xf32>
    %14 = vector.broadcast %13 : vector<1x128xf32> to vector<8x128xf32>
    %15 = arith.addf %12, %14 : vector<8x128xf32>
    %16 = arith.addf %15, %0 : vector<8x128xf32>
    %cst_9 = arith.constant 0.000000e+00 : f32
    %17 = vector.broadcast %cst_9 : f32 to vector<8x128xf32>
    %18 = arith.maximumf %16, %17 : vector<8x128xf32>
    %c0_10 = arith.constant 0 : index
    %c0_11 = arith.constant 0 : index
    %19 = vector.load %arg5[%c0_10, %c0_11] : memref<8x128xf32, #tpu.memory_space<vmem>>, vector<8x128xf32>
    tpu.vector_store %arg5[%c0_10, %c0_11], %18 {strides = array<i32>} : memref<8x128xf32, #tpu.memory_space<vmem>>, vector<8x128xf32>,
    return
  }
  func.func @transform_0(%arg0: i32) -> (i32, i32) {
    %c0_i32 = arith.constant 0 : i32
    %c0_i32_0 = arith.constant 0 : i32
    return %arg0, %c0_i32 : i32, i32
  }
  func.func @transform_1(%arg0: i32) -> (i32, i32) {
    %c0_i32 = arith.constant 0 : i32
    %c0_i32_0 = arith.constant 0 : i32
    %c0_i32_1 = arith.constant 0 : i32
    return %c0_i32, %c0_i32_0 : i32, i32
  }
  func.func @transform_2(%arg0: i32) -> (i32, i32) {
    %c0_i32 = arith.constant 0 : i32
    %c0_i32_0 = arith.constant 0 : i32
    %c0_i32_1 = arith.constant 0 : i32
    return %c0_i32, %c0_i32_0 : i32, i32
  }
  func.func @transform_3(%arg0: i32) -> (i32, i32) {
    %c0_i32 = arith.constant 0 : i32
    %c0_i32_0 = arith.constant 0 : i32
    %c0_i32_1 = arith.constant 0 : i32
    return %c0_i32, %c0_i32_0 : i32, i32
  }
  func.func @transform_4(%arg0: i32) -> (i32, i32) {
    %c0_i32 = arith.constant 0 : i32
    %c0_i32_0 = arith.constant 0 : i32
    return %arg0, %c0_i32 : i32, i32
  }
}

module attributes {stable_mosaic.version = 11 : i64} {
  func.func @residual_block_kernel(%arg0: i32, %arg1: memref<8x128xf32, #tpu.memory_space<vmem>>, %arg2: memref<128x128xbf16, #tpu.memory_space<vmem>>, %arg3: memref<128x128xbf16, #tpu.memory_space<vmem>>, %arg4: memref<2x128xf32, #tpu.memory_space<vmem>>, %arg5: memref<8x128xf32, #tpu.memory_space<vmem>>) attributes {dimension_semantics = [#tpu.dimension_semantics<parallel>], iteration_bounds = array<i64: 1>, scalar_prefetch = 0 : i64, scratch_operands = 0 : i64, tpu.core_type = #tpu.core_type<tc>, window_params = [{transform_indices = @transform_0, window_bounds = array<i64: 8, 128>}, {pipeline_mode = #tpu.pipeline_mode<synchronous>, transform_indices = @transform_1, window_bounds = array<i64: 128, 128>}, {pipeline_mode = #tpu.pipeline_mode<synchronous>, transform_indices = @transform_2, window_bounds = array<i64: 128, 128>}, {pipeline_mode = #tpu.pipeline_mode<synchronous>, transform_indices = @transform_3, window_bounds = array<i64: 2, 128>}, {transform_indices = @transform_4, window_bounds = array<i64: 8, 128>}]} {
    %c0 = arith.constant 0 : index
    %c0_0 = arith.constant 0 : index
    %0 = vector.load %arg1[%c0, %c0_0] : memref<8x128xf32, #tpu.memory_space<vmem>>, vector<8x128xf32>
    %c0_1 = arith.constant 0 : index
    %c0_2 = arith.constant 0 : index
    %1 = vector.load %arg4[%c0_1, %c0_2] : memref<2x128xf32, #tpu.memory_space<vmem>>, vector<2x128xf32>
    %2 = arith.truncf %0 : vector<8x128xf32> to vector<8x128xbf16>
    %c0_3 = arith.constant 0 : index
    %c0_4 = arith.constant 0 : index
    %3 = vector.load %arg2[%c0_3, %c0_4] : memref<128x128xbf16, #tpu.memory_space<vmem>>, vector<128x128xbf16>
    %cst = arith.constant dense<0.000000e+00> : vector<8x128xf32>
    %4 = tpu.matmul %2, %3, %cst {dimension_numbers = #tpu.dot_dimension_numbers<[1], [0], [0], [1], [0, 0, 1, 1], [], []>} : vector<8x128xbf16>, vector<128x128xbf16>, vector<8x128xf32> -> vector<8x128xf32>
    %5 = vector.extract_strided_slice %1 {offsets = [0, 0], sizes = [1, 128], strides = [1, 1]} : vector<2x128xf32> to vector<1x128xf32>
    %6 = vector.broadcast %5 : vector<1x128xf32> to vector<8x128xf32>
    %7 = arith.addf %4, %6 : vector<8x128xf32>
    %cst_5 = arith.constant 0.000000e+00 : f32
    %8 = vector.broadcast %cst_5 : f32 to vector<8x128xf32>
    %9 = arith.maximumf %7, %8 : vector<8x128xf32>
    %10 = arith.truncf %9 : vector<8x128xf32> to vector<8x128xbf16>
    %c0_6 = arith.constant 0 : index
    %c0_7 = arith.constant 0 : index
    %11 = vector.load %arg3[%c0_6, %c0_7] : memref<128x128xbf16, #tpu.memory_space<vmem>>, vector<128x128xbf16>
    %cst_8 = arith.constant dense<0.000000e+00> : vector<8x128xf32>
    %12 = tpu.matmul %10, %11, %cst_8 {dimension_numbers = #tpu.dot_dimension_numbers<[1], [0], [0], [1], [0, 0, 1, 1], [], []>} : vector<8x128xbf16>, vector<128x128xbf16>, vector<8x128xf32> -> vector<8x128xf32>
    %13 = vector.extract_strided_slice %1 {offsets = [1, 0], sizes = [1, 128], strides = [1, 1]} : vector<2x128xf32> to vector<1x128xf32>
    %14 = vector.broadcast %13 : vector<1x128xf32> to vector<8x128xf32>
    %15 = arith.addf %12, %14 : vector<8x128xf32>
    %16 = arith.addf %15, %0 : vector<8x128xf32>
    %cst_9 = arith.constant 0.000000e+00 : f32
    %17 = vector.broadcast %cst_9 : f32 to vector<8x128xf32>
    %18 = arith.maximumf %16, %17 : vector<8x128xf32>
    %c0_10 = arith.constant 0 : index
    %c0_11 = arith.constant 0 : index
    %19 = vector.load %arg5[%c0_10, %c0_11] : memref<8x128xf32, #tpu.memory_space<vmem>>, vector<8x128xf32>
    tpu.vector_store %arg5[%c0_10, %c0_11], %18 {strides = array<i32>} : memref<8x128xf32, #tpu.memory_space<vmem>>, vector<8x128xf32>,
    return
  }
  func.func @transform_0(%arg0: i32) -> (i32, i32) {
    %c0_i32 = arith.constant 0 : i32
    %c0_i32_0 = arith.constant 0 : i32
    return %arg0, %c0_i32 : i32, i32
  }
  func.func @transform_1(%arg0: i32) -> (i32, i32) {
    %c0_i32 = arith.constant 0 : i32
    %c0_i32_0 = arith.constant 0 : i32
    %c0_i32_1 = arith.constant 0 : i32
    return %c0_i32, %c0_i32_0 : i32, i32
  }
  func.func @transform_2(%arg0: i32) -> (i32, i32) {
    %c0_i32 = arith.constant 0 : i32
    %c0_i32_0 = arith.constant 0 : i32
    %c0_i32_1 = arith.constant 0 : i32
    return %c0_i32, %c0_i32_0 : i32, i32
  }
  func.func @transform_3(%arg0: i32) -> (i32, i32) {
    %c0_i32 = arith.constant 0 : i32
    %c0_i32_0 = arith.constant 0 : i32
    %c0_i32_1 = arith.constant 0 : i32
    return %c0_i32, %c0_i32_0 : i32, i32
  }
  func.func @transform_4(%arg0: i32) -> (i32, i32) {
    %c0_i32 = arith.constant 0 : i32
    %c0_i32_0 = arith.constant 0 : i32
    return %arg0, %c0_i32 : i32, i32
  }
}

</mosaic_0001>

<llo_original>
// kernel: tpu_custom_call.1
$region0: #{tpu_custom_call.1}
  #allocation0 [shape = 'u32[]', space=smem, size = 0x4, offset = 0x4, fixed_abs, tag = 'smem constant byte address 0x4 - core index']
  #allocation1 [shape = 'u32[144,128]{1,0:T(1,128)}', space=vmem, size = 0x12000, scoped, tag = 'internal scratch']
  %s0 = inlined_call_operand.hbm [shape: f32[8,128], index: 0, kind: input, shape index: {}]
  %s1 = inlined_call_operand.hbm [shape: bf16[128,128], index: 1, kind: input, shape index: {}]
  %s2 = inlined_call_operand.hbm [shape: bf16[128,128], index: 2, kind: input, shape index: {}]
  %s3 = inlined_call_operand.vmem [shape: f32[2,128], index: 3, kind: input, shape index: {}]
  %s4 = inlined_call_operand.hbm [shape: f32[8,128], index: 4, kind: output, shape index: {}]
  %s5 = sld [smem:[#allocation0]]
  $region38: #{tpu_custom_call.1} parent=0
    _
  %s7 = ssub.s32 1, %s5
  %s8 = scalar_select 0, %s7, %s5
  $region1: #{tpu_custom_call.1} parent=0
    #allocation2 [shape = 'u8[4096]{0}', space=vmem, size = 0x1000, scoped, tag = 'input window, operand 0, single buffered']
    #allocation3 [shape = 's32[1]{0}', space=sflag, size = 0x4, scoped, tag = 'scoped memory for tpu_custom_call.1']
    #allocation4 [shape = 's32[1]{0}', space=sflag, size = 0x4, scoped, tag = 'scoped memory for tpu_custom_call.1']
    #allocation5 [shape = 'u8[32768]{0}', space=vmem, size = 0x8000, scoped, tag = 'input window, operand 1, single buffered']
    #allocation6 [shape = 's32[1]{0}', space=sflag, size = 0x4, scoped, tag = 'scoped memory for tpu_custom_call.1']
    #allocation7 [shape = 'u8[32768]{0}', space=vmem, size = 0x8000, scoped, tag = 'input window, operand 2, single buffered']
    #allocation8 [shape = 'u8[4096]{0}', space=vmem, size = 0x1000, scoped, tag = 'output window, operand 0, single buffered']
    %9 = vsyncpa [#allocation3], 0
    %10 = vsyncpa [#allocation6], 0
    %11 = vsyncpa [#allocation4], 0
    // Predicated region
    $region2: #{tpu_custom_call.1} parent=1 // pred_check
      _
    $region3: #{tpu_custom_call.1} parent=1 // pred_check_branch
      %13 = sbr.rel (0) target = $region5
    $region4: #{tpu_custom_call.1} parent=1 // pred_region
      %s15 = ssub.s32 128, 128
      %16 = vsyncadd [#allocation3], %s15
      %s18 = sshll.u32 [#allocation2], 4
      %s19 = int_to_ptr.vmem [resolvable:$true] %s18
      %21 = dma.hbm_to_vmem [thread:$0]  %s0, 128, %s19, [#allocation3]
    $region5: #{tpu_custom_call.1} parent=1 // pred_fallthru
      _
    // Predicated region
    $region6: #{tpu_custom_call.1} parent=1 // pred_check
      _
    $region7: #{tpu_custom_call.1} parent=1 // pred_check_branch
      %23 = sbr.rel (0) target = $region9
    $region8: #{tpu_custom_call.1} parent=1 // pred_region
      %s25 = ssub.s32 1024, 1024
      %26 = vsyncadd [#allocation6], %s25
      %s27 = sshll.u32 [#allocation5], 4
      %s28 = int_to_ptr.vmem [resolvable:$true] %s27
      %33 = dma.hbm_to_vmem [thread:$0]  %s1, 1024, %s28, [#allocation6], 64, 64, 4
    $region9: #{tpu_custom_call.1} parent=1 // pred_fallthru
      _
    // Predicated region
    $region10: #{tpu_custom_call.1} parent=1 // pred_check
      _
    $region11: #{tpu_custom_call.1} parent=1 // pred_check_branch
      %35 = sbr.rel (0) target = $region13
    $region12: #{tpu_custom_call.1} parent=1 // pred_region
      %s37 = ssub.s32 1024, 1024
      %38 = vsyncadd [#allocation6], %s37
      %s39 = sshll.u32 [#allocation7], 4
      %s40 = int_to_ptr.vmem [resolvable:$true] %s39
      %45 = dma.hbm_to_vmem [thread:$0]  %s2, 1024, %s40, [#allocation6], 64, 64, 4
    $region13: #{tpu_custom_call.1} parent=1 // pred_fallthru
      _
    // Predicated region
    $region14: #{tpu_custom_call.1} parent=1 // pred_check
      _
    $region15: #{tpu_custom_call.1} parent=1 // pred_check_branch
      %47 = sbr.rel (0) target = $region17
    $region16: #{tpu_custom_call.1} parent=1 // pred_region
      _
    $region17: #{tpu_custom_call.1} parent=1 // pred_fallthru
      _
    // Predicated region
    $region18: #{tpu_custom_call.1} parent=1 // pred_check
      _
    $region19: #{tpu_custom_call.1} parent=1 // pred_check_branch
      %49 = sbr.rel (0) target = $region21
    $region20: #{tpu_custom_call.1} parent=1 // pred_region
      %50 = dma.done [#allocation3], 128
    $region21: #{tpu_custom_call.1} parent=1 // pred_fallthru
      _
    // Predicated region
    $region22: #{tpu_custom_call.1} parent=1 // pred_check
      _
    $region23: #{tpu_custom_call.1} parent=1 // pred_check_branch
      %52 = sbr.rel (0) target = $region25
    $region24: #{tpu_custom_call.1} parent=1 // pred_region
      %53 = dma.done [#allocation6], 1024
    $region25: #{tpu_custom_call.1} parent=1 // pred_fallthru
      _
    // Predicated region
    $region26: #{tpu_custom_call.1} parent=1 // pred_check
      _
    $region27: #{tpu_custom_call.1} parent=1 // pred_check_branch
      %55 = sbr.rel (0) target = $region29
    $region28: #{tpu_custom_call.1} parent=1 // pred_region
      %56 = dma.done [#allocation6], 1024
    $region29: #{tpu_custom_call.1} parent=1 // pred_fallthru
      _
    %v58 = vld [vmem:[#allocation2] sm:$0xff]
    %v59 = vld [vmem:[%s3] sm:$0x3]
    %v60 = vpack.c.bf16 %v58, %v58
    %v61 = vld [vmem:[#allocation5] sm:$0xf]
    %v62 = vld [vmem:[#allocation5 + $0x4] sm:$0xf]
    %v63 = vld [vmem:[#allocation5 + $0x8] sm:$0xf]
    %v64 = vld [vmem:[#allocation5 + $0xc] sm:$0xf]
    %v65 = vld [vmem:[#allocation5 + $0x10] sm:$0xf]
    %v66 = vld [vmem:[#allocation5 + $0x14] sm:$0xf]
    %v67 = vld [vmem:[#allocation5 + $0x18] sm:$0xf]
    %v68 = vld [vmem:[#allocation5 + $0x1c] sm:$0xf]
    %v69 = vld [vmem:[#allocation5 + $0x20] sm:$0xf]
    %v70 = vld [vmem:[#allocation5 + $0x24] sm:$0xf]
    %v71 = vld [vmem:[#allocation5 + $0x28] sm:$0xf]
    %v72 = vld [vmem:[#allocation5 + $0x2c] sm:$0xf]
    %v73 = vld [vmem:[#allocation5 + $0x30] sm:$0xf]
    %v74 = vld [vmem:[#allocation5 + $0x34] sm:$0xf]
    %v75 = vld [vmem:[#allocation5 + $0x38] sm:$0xf]
    %v76 = vld [vmem:[#allocation5 + $0x3c] sm:$0xf]
    %v77 = vlaneseq
    %v78 = vshrl.u32 %v77, 7
    %v79 = vsub.s32 0, %v78
    %v80 = vrot.slane %v59, %v79
    %v97 = vunpack.c.l.b16 %v61
    %v98 = vunpack.c.l.b16 %v62
    %v99 = vunpack.c.l.b16 %v63
    %v100 = vunpack.c.l.b16 %v64
    %v101 = vunpack.c.l.b16 %v65
    %v102 = vunpack.c.l.b16 %v66
    %v103 = vunpack.c.l.b16 %v67
    %v104 = vunpack.c.l.b16 %v68
    %v105 = vunpack.c.l.b16 %v69
    %v106 = vunpack.c.l.b16 %v70
    %v107 = vunpack.c.l.b16 %v71
    %v108 = vunpack.c.l.b16 %v72
    %v109 = vunpack.c.l.b16 %v73
    %v110 = vunpack.c.l.b16 %v74
    %v111 = vunpack.c.l.b16 %v75
    %v112 = vunpack.c.l.b16 %v76
    %v113 = vpack.c.b16 %v98, %v97
    %v114 = vpack.c.b16 %v100, %v99
    %v115 = vpack.c.b16 %v102, %v101
    %v116 = vpack.c.b16 %v104, %v103
    %v117 = vpack.c.b16 %v106, %v105
    %v118 = vpack.c.b16 %v108, %v107
    %v119 = vpack.c.b16 %v110, %v109
    %v120 = vpack.c.b16 %v112, %v111
    %129 = vmatprep.subr.bf16.mxu0 0
    %130 = vmatpush1.bf16.msra.mxu0 %v113
    %131 = vmatprep.subr.bf16.mxu0 0
    %132 = vmatpush1.bf16.msra.mxu0 %v114
    %133 = vmatprep.subr.bf16.mxu0 0
    %134 = vmatpush1.bf16.msra.mxu0 %v115
    %135 = vmatprep.subr.bf16.mxu0 0
    %136 = vmatpush1.bf16.msra.mxu0 %v116
    %137 = vmatprep.subr.bf16.mxu0 0
    %138 = vmatpush1.bf16.msra.mxu0 %v117
    %139 = vmatprep.subr.bf16.mxu0 0
    %140 = vmatpush1.bf16.msra.mxu0 %v118
    %141 = vmatprep.subr.bf16.mxu0 0
    %142 = vmatpush1.bf16.msra.mxu0 %v119
    %143 = vmatprep.subr.bf16.mxu0 0
    %144 = vmatpush1.bf16.msra.mxu0 %v120
    %145 = vmatprep.subr.bf16.mxu0 0
    %146 = vmatpush1.bf16.msra.mxu0 0
    %147 = vmatprep.subr.bf16.mxu0 0
    %148 = vmatpush1.bf16.msra.mxu0 0
    %149 = vmatprep.subr.bf16.mxu0 0
    %150 = vmatpush1.bf16.msra.mxu0 0
    %151 = vmatprep.subr.bf16.mxu0 0
    %152 = vmatpush1.bf16.msra.mxu0 0
    %153 = vmatprep.subr.bf16.mxu0 0
    %154 = vmatpush1.bf16.msra.mxu0 0
    %155 = vmatprep.subr.bf16.mxu0 0
    %156 = vmatpush1.bf16.msra.mxu0 0
    %157 = vmatprep.subr.bf16.mxu0 0
    %158 = vmatpush1.bf16.msra.mxu0 0
    %159 = vmatprep.subr.bf16.mxu0 0
    %160 = vmatpush1.bf16.msra.mxu0 0
    %161 = vmatprep.mubr.bf16.mxu0 0
    %162 = vmatmul.mubr.bf16.gmra.mrb[0].mxu0 %v60
    %v163 = vpop.f32.mrb[0].mxu0
    %v164 = vadd.f32 %v80, %v163
    %v165 = vpop.f32.mrb[0].mxu0
    %v166 = vpop.f32.mrb[0].mxu0
    %v167 = vpop.f32.mrb[0].mxu0
    %168 = vdwg.mxu0
    %v169 = vmax.f32 %v164, 0.0
    %v170 = vpack.c.bf16 %v169, %v169
    %v171 = vld [vmem:[#allocation7] sm:$0xf]
    %v172 = vld [vmem:[#allocation7 + $0x4] sm:$0xf]
    %v173 = vld [vmem:[#allocation7 + $0x8] sm:$0xf]
    %v174 = vld [vmem:[#allocation7 + $0xc] sm:$0xf]
    %v175 = vld [vmem:[#allocation7 + $0x10] sm:$0xf]
    %v176 = vld [vmem:[#allocation7 + $0x14] sm:$0xf]
    %v177 = vld [vmem:[#allocation7 + $0x18] sm:$0xf]
    %v178 = vld [vmem:[#allocation7 + $0x1c] sm:$0xf]
    %v179 = vld [vmem:[#allocation7 + $0x20] sm:$0xf]
    %v180 = vld [vmem:[#allocation7 + $0x24] sm:$0xf]
    %v181 = vld [vmem:[#allocation7 + $0x28] sm:$0xf]
    %v182 = vld [vmem:[#allocation7 + $0x2c] sm:$0xf]
    %v183 = vld [vmem:[#allocation7 + $0x30] sm:$0xf]
    %v184 = vld [vmem:[#allocation7 + $0x34] sm:$0xf]
    %v185 = vld [vmem:[#allocation7 + $0x38] sm:$0xf]
    %v186 = vld [vmem:[#allocation7 + $0x3c] sm:$0xf]
    %v187 = vlaneseq
    %v188 = vshrl.u32 %v187, 7
    %v189 = vsub.s32 1, %v188
    %v190 = vrot.slane %v59, %v189
    %v207 = vunpack.c.l.b16 %v171
    %v208 = vunpack.c.l.b16 %v172
    %v209 = vunpack.c.l.b16 %v173
    %v210 = vunpack.c.l.b16 %v174
    %v211 = vunpack.c.l.b16 %v175
    %v212 = vunpack.c.l.b16 %v176
    %v213 = vunpack.c.l.b16 %v177
    %v214 = vunpack.c.l.b16 %v178
    %v215 = vunpack.c.l.b16 %v179
    %v216 = vunpack.c.l.b16 %v180
    %v217 = vunpack.c.l.b16 %v181
    %v218 = vunpack.c.l.b16 %v182
    %v219 = vunpack.c.l.b16 %v183
    %v220 = vunpack.c.l.b16 %v184
    %v221 = vunpack.c.l.b16 %v185
    %v222 = vunpack.c.l.b16 %v186
    %v223 = vpack.c.b16 %v208, %v207
    %v224 = vpack.c.b16 %v210, %v209
    %v225 = vpack.c.b16 %v212, %v211
    %v226 = vpack.c.b16 %v214, %v213
    %v227 = vpack.c.b16 %v216, %v215
    %v228 = vpack.c.b16 %v218, %v217
    %v229 = vpack.c.b16 %v220, %v219
    %v230 = vpack.c.b16 %v222, %v221
    %239 = vmatprep.subr.bf16.mxu0 0
    %240 = vmatpush1.bf16.msra.mxu0 %v223
    %241 = vmatprep.subr.bf16.mxu0 0
    %242 = vmatpush1.bf16.msra.mxu0 %v224
    %243 = vmatprep.subr.bf16.mxu0 0
    %244 = vmatpush1.bf16.msra.mxu0 %v225
    %245 = vmatprep.subr.bf16.mxu0 0
    %246 = vmatpush1.bf16.msra.mxu0 %v226
    %247 = vmatprep.subr.bf16.mxu0 0
    %248 = vmatpush1.bf16.msra.mxu0 %v227
    %249 = vmatprep.subr.bf16.mxu0 0
    %250 = vmatpush1.bf16.msra.mxu0 %v228
    %251 = vmatprep.subr.bf16.mxu0 0
    %252 = vmatpush1.bf16.msra.mxu0 %v229
    %253 = vmatprep.subr.bf16.mxu0 0
    %254 = vmatpush1.bf16.msra.mxu0 %v230
    %255 = vmatprep.subr.bf16.mxu0 0
    %256 = vmatpush1.bf16.msra.mxu0 0
    %257 = vmatprep.subr.bf16.mxu0 0
    %258 = vmatpush1.bf16.msra.mxu0 0
    %259 = vmatprep.subr.bf16.mxu0 0
    %260 = vmatpush1.bf16.msra.mxu0 0
    %261 = vmatprep.subr.bf16.mxu0 0
    %262 = vmatpush1.bf16.msra.mxu0 0
    %263 = vmatprep.subr.bf16.mxu0 0
    %264 = vmatpush1.bf16.msra.mxu0 0
    %265 = vmatprep.subr.bf16.mxu0 0
    %266 = vmatpush1.bf16.msra.mxu0 0
    %267 = vmatprep.subr.bf16.mxu0 0
    %268 = vmatpush1.bf16.msra.mxu0 0
    %269 = vmatprep.subr.bf16.mxu0 0
    %270 = vmatpush1.bf16.msra.mxu0 0
    %271 = vmatprep.mubr.bf16.mxu0 0
    %272 = vmatmul.mubr.bf16.gmra.mrb[0].mxu0 %v170
    %v273 = vpop.f32.mrb[0].mxu0
    %v274 = vadd.f32 %v190, %v273
    %v275 = vpop.f32.mrb[0].mxu0
    %v276 = vpop.f32.mrb[0].mxu0
    %v277 = vpop.f32.mrb[0].mxu0
    %278 = vdwg.mxu0
    %v279 = vadd.f32 %v274, %v58
    %v280 = vmax.f32 %v279, 0.0
    %281 = vst [vmem:[#allocation8] sm:$0xff] %v280
    // Predicated region
    $region30: #{tpu_custom_call.1} parent=1 // pred_check
      _
    $region31: #{tpu_custom_call.1} parent=1 // pred_check_branch
      %283 = sbr.rel (0) target = $region33
    $region32: #{tpu_custom_call.1} parent=1 // pred_region
      %s285 = ssub.s32 128, 128
      %286 = vsyncadd [#allocation4], %s285
      %s288 = sshll.u32 [#allocation8], 4
      %s289 = int_to_ptr.vmem [resolvable:$true] %s288
      %291 = dma.vmem_to_hbm [thread:$0]  %s289, 128, %s4, [#allocation4]
    $region33: #{tpu_custom_call.1} parent=1 // pred_fallthru
      _
    // Predicated region
    $region34: #{tpu_custom_call.1} parent=1 // pred_check
      _
    $region35: #{tpu_custom_call.1} parent=1 // pred_check_branch
      %293 = sbr.rel (0) target = $region37
    $region36: #{tpu_custom_call.1} parent=1 // pred_region
      %294 = dma.done [#allocation4], 128
    $region37: #{tpu_custom_call.1} parent=1 // pred_fallthru
      _
    %295 = vsyncpa [#allocation3], 1
    %296 = vsyncpa [#allocation6], 1
    %297 = vsyncpa [#allocation4], 1

// kernel: tpu_custom_call.1
$region0: #{tpu_custom_call.1}
  #allocation0 [shape = 'u32[]', space=smem, size = 0x4, offset = 0x4, fixed_abs, tag = 'smem constant byte address 0x4 - core index']
  #allocation1 [shape = 'u32[144,128]{1,0:T(1,128)}', space=vmem, size = 0x12000, scoped, tag = 'internal scratch']
  %s0 = inlined_call_operand.hbm [shape: f32[8,128], index: 0, kind: input, shape index: {}]
  %s1 = inlined_call_operand.hbm [shape: bf16[128,128], index: 1, kind: input, shape index: {}]
  %s2 = inlined_call_operand.hbm [shape: bf16[128,128], index: 2, kind: input, shape index: {}]
  %s3 = inlined_call_operand.vmem [shape: f32[2,128], index: 3, kind: input, shape index: {}]
  %s4 = inlined_call_operand.hbm [shape: f32[8,128], index: 4, kind: output, shape index: {}]
  %s5 = sld [smem:[#allocation0]]
  $region38: #{tpu_custom_call.1} parent=0
    _
  %s7 = ssub.s32 1, %s5
  %s8 = scalar_select 0, %s7, %s5
  $region1: #{tpu_custom_call.1} parent=0
    #allocation2 [shape = 'u8[4096]{0}', space=vmem, size = 0x1000, scoped, tag = 'input window, operand 0, single buffered']
    #allocation3 [shape = 's32[1]{0}', space=sflag, size = 0x4, scoped, tag = 'scoped memory for tpu_custom_call.1']
    #allocation4 [shape = 's32[1]{0}', space=sflag, size = 0x4, scoped, tag = 'scoped memory for tpu_custom_call.1']
    #allocation5 [shape = 'u8[32768]{0}', space=vmem, size = 0x8000, scoped, tag = 'input window, operand 1, single buffered']
    #allocation6 [shape = 's32[1]{0}', space=sflag, size = 0x4, scoped, tag = 'scoped memory for tpu_custom_call.1']
    #allocation7 [shape = 'u8[32768]{0}', space=vmem, size = 0x8000, scoped, tag = 'input window, operand 2, single buffered']
    #allocation8 [shape = 'u8[4096]{0}', space=vmem, size = 0x1000, scoped, tag = 'output window, operand 0, single buffered']
    %9 = vsyncpa [#allocation3], 0
    %10 = vsyncpa [#allocation6], 0
    %11 = vsyncpa [#allocation4], 0
    // Predicated region
    $region2: #{tpu_custom_call.1} parent=1 // pred_check
      _
    $region3: #{tpu_custom_call.1} parent=1 // pred_check_branch
      %13 = sbr.rel (0) target = $region5
    $region4: #{tpu_custom_call.1} parent=1 // pred_region
      %s15 = ssub.s32 128, 128
      %16 = vsyncadd [#allocation3], %s15
      %s18 = sshll.u32 [#allocation2], 4
      %s19 = int_to_ptr.vmem [resolvable:$true] %s18
      %21 = dma.hbm_to_vmem [thread:$0]  %s0, 128, %s19, [#allocation3]
    $region5: #{tpu_custom_call.1} parent=1 // pred_fallthru
      _
    // Predicated region
    $region6: #{tpu_custom_call.1} parent=1 // pred_check
      _
    $region7: #{tpu_custom_call.1} parent=1 // pred_check_branch
      %23 = sbr.rel (0) target = $region9
    $region8: #{tpu_custom_call.1} parent=1 // pred_region
      %s25 = ssub.s32 1024, 1024
      %26 = vsyncadd [#allocation6], %s25
      %s27 = sshll.u32 [#allocation5], 4
      %s28 = int_to_ptr.vmem [resolvable:$true] %s27
      %33 = dma.hbm_to_vmem [thread:$0]  %s1, 1024, %s28, [#allocation6], 64, 64, 4
    $region9: #{tpu_custom_call.1} parent=1 // pred_fallthru
      _
    // Predicated region
    $region10: #{tpu_custom_call.1} parent=1 // pred_check
      _
    $region11: #{tpu_custom_call.1} parent=1 // pred_check_branch
      %35 = sbr.rel (0) target = $region13
    $region12: #{tpu_custom_call.1} parent=1 // pred_region
      %s37 = ssub.s32 1024, 1024
      %38 = vsyncadd [#allocation6], %s37
      %s39 = sshll.u32 [#allocation7], 4
      %s40 = int_to_ptr.vmem [resolvable:$true] %s39
      %45 = dma.hbm_to_vmem [thread:$0]  %s2, 1024, %s40, [#allocation6], 64, 64, 4
    $region13: #{tpu_custom_call.1} parent=1 // pred_fallthru
      _
    // Predicated region
    $region14: #{tpu_custom_call.1} parent=1 // pred_check
      _
    $region15: #{tpu_custom_call.1} parent=1 // pred_check_branch
      %47 = sbr.rel (0) target = $region17
    $region16: #{tpu_custom_call.1} parent=1 // pred_region
      _
    $region17: #{tpu_custom_call.1} parent=1 // pred_fallthru
      _
    // Predicated region
    $region18: #{tpu_custom_call.1} parent=1 // pred_check
      _
    $region19: #{tpu_custom_call.1} parent=1 // pred_check_branch
      %49 = sbr.rel (0) target = $region21
    $region20: #{tpu_custom_call.1} parent=1 // pred_region
      %50 = dma.done [#allocation3], 128
    $region21: #{tpu_custom_call.1} parent=1 // pred_fallthru
      _
    // Predicated region
    $region22: #{tpu_custom_call.1} parent=1 // pred_check
      _
    $region23: #{tpu_custom_call.1} parent=1 // pred_check_branch
      %52 = sbr.rel (0) target = $region25
    $region24: #{tpu_custom_call.1} parent=1 // pred_region
      %53 = dma.done [#allocation6], 1024
    $region25: #{tpu_custom_call.1} parent=1 // pred_fallthru
      _
    // Predicated region
    $region26: #{tpu_custom_call.1} parent=1 // pred_check
      _
    $region27: #{tpu_custom_call.1} parent=1 // pred_check_branch
      %55 = sbr.rel (0) target = $region29
    $region28: #{tpu_custom_call.1} parent=1 // pred_region
      %56 = dma.done [#allocation6], 1024
    $region29: #{tpu_custom_call.1} parent=1 // pred_fallthru
      _
    %v58 = vld [vmem:[#allocation2] sm:$0xff]
    %v59 = vld [vmem:[%s3] sm:$0x3]
    %v60 = vpack.c.bf16 %v58, %v58
    %v61 = vld [vmem:[#allocation5] sm:$0xf]
    %v62 = vld [vmem:[#allocation5 + $0x4] sm:$0xf]
    %v63 = vld [vmem:[#allocation5 + $0x8] sm:$0xf]
    %v64 = vld [vmem:[#allocation5 + $0xc] sm:$0xf]
    %v65 = vld [vmem:[#allocation5 + $0x10] sm:$0xf]
    %v66 = vld [vmem:[#allocation5 + $0x14] sm:$0xf]
    %v67 = vld [vmem:[#allocation5 + $0x18] sm:$0xf]
    %v68 = vld [vmem:[#allocation5 + $0x1c] sm:$0xf]
    %v69 = vld [vmem:[#allocation5 + $0x20] sm:$0xf]
    %v70 = vld [vmem:[#allocation5 + $0x24] sm:$0xf]
    %v71 = vld [vmem:[#allocation5 + $0x28] sm:$0xf]
    %v72 = vld [vmem:[#allocation5 + $0x2c] sm:$0xf]
    %v73 = vld [vmem:[#allocation5 + $0x30] sm:$0xf]
    %v74 = vld [vmem:[#allocation5 + $0x34] sm:$0xf]
    %v75 = vld [vmem:[#allocation5 + $0x38] sm:$0xf]
    %v76 = vld [vmem:[#allocation5 + $0x3c] sm:$0xf]
    %v77 = vlaneseq
    %v78 = vshrl.u32 %v77, 7
    %v79 = vsub.s32 0, %v78
    %v80 = vrot.slane %v59, %v79
    %v97 = vunpack.c.l.b16 %v61
    %v98 = vunpack.c.l.b16 %v62
    %v99 = vunpack.c.l.b16 %v63
    %v100 = vunpack.c.l.b16 %v64
    %v101 = vunpack.c.l.b16 %v65
    %v102 = vunpack.c.l.b16 %v66
    %v103 = vunpack.c.l.b16 %v67
    %v104 = vunpack.c.l.b16 %v68
    %v105 = vunpack.c.l.b16 %v69
    %v106 = vunpack.c.l.b16 %v70
    %v107 = vunpack.c.l.b16 %v71
    %v108 = vunpack.c.l.b16 %v72
    %v109 = vunpack.c.l.b16 %v73
    %v110 = vunpack.c.l.b16 %v74
    %v111 = vunpack.c.l.b16 %v75
    %v112 = vunpack.c.l.b16 %v76
    %v113 = vpack.c.b16 %v98, %v97
    %v114 = vpack.c.b16 %v100, %v99
    %v115 = vpack.c.b16 %v102, %v101
    %v116 = vpack.c.b16 %v104, %v103
    %v117 = vpack.c.b16 %v106, %v105
    %v118 = vpack.c.b16 %v108, %v107
    %v119 = vpack.c.b16 %v110, %v109
    %v120 = vpack.c.b16 %v112, %v111
    %129 = vmatprep.subr.bf16.mxu0 0
    %130 = vmatpush1.bf16.msra.mxu0 %v113
    %131 = vmatprep.subr.bf16.mxu0 0
    %132 = vmatpush1.bf16.msra.mxu0 %v114
    %133 = vmatprep.subr.bf16.mxu0 0
    %134 = vmatpush1.bf16.msra.mxu0 %v115
    %135 = vmatprep.subr.bf16.mxu0 0
    %136 = vmatpush1.bf16.msra.mxu0 %v116
    %137 = vmatprep.subr.bf16.mxu0 0
    %138 = vmatpush1.bf16.msra.mxu0 %v117
    %139 = vmatprep.subr.bf16.mxu0 0
    %140 = vmatpush1.bf16.msra.mxu0 %v118
    %141 = vmatprep.subr.bf16.mxu0 0
    %142 = vmatpush1.bf16.msra.mxu0 %v119
    %143 = vmatprep.subr.bf16.mxu0 0
    %144 = vmatpush1.bf16.msra.mxu0 %v120
    %145 = vmatprep.subr.bf16.mxu0 0
    %146 = vmatpush1.bf16.msra.mxu0 0
    %147 = vmatprep.subr.bf16.mxu0 0
    %148 = vmatpush1.bf16.msra.mxu0 0
    %149 = vmatprep.subr.bf16.mxu0 0
    %150 = vmatpush1.bf16.msra.mxu0 0
    %151 = vmatprep.subr.bf16.mxu0 0
    %152 = vmatpush1.bf16.msra.mxu0 0
    %153 = vmatprep.subr.bf16.mxu0 0
    %154 = vmatpush1.bf16.msra.mxu0 0
    %155 = vmatprep.subr.bf16.mxu0 0
    %156 = vmatpush1.bf16.msra.mxu0 0
    %157 = vmatprep.subr.bf16.mxu0 0
    %158 = vmatpush1.bf16.msra.mxu0 0
    %159 = vmatprep.subr.bf16.mxu0 0
    %160 = vmatpush1.bf16.msra.mxu0 0
    %161 = vmatprep.mubr.bf16.mxu0 0
    %162 = vmatmul.mubr.bf16.gmra.mrb[0].mxu0 %v60
    %v163 = vpop.f32.mrb[0].mxu0
    %v164 = vadd.f32 %v80, %v163
    %v165 = vpop.f32.mrb[0].mxu0
    %v166 = vpop.f32.mrb[0].mxu0
    %v167 = vpop.f32.mrb[0].mxu0
    %168 = vdwg.mxu0
    %v169 = vmax.f32 %v164, 0.0
    %v170 = vpack.c.bf16 %v169, %v169
    %v171 = vld [vmem:[#allocation7] sm:$0xf]
    %v172 = vld [vmem:[#allocation7 + $0x4] sm:$0xf]
    %v173 = vld [vmem:[#allocation7 + $0x8] sm:$0xf]
    %v174 = vld [vmem:[#allocation7 + $0xc] sm:$0xf]
    %v175 = vld [vmem:[#allocation7 + $0x10] sm:$0xf]
    %v176 = vld [vmem:[#allocation7 + $0x14] sm:$0xf]
    %v177 = vld [vmem:[#allocation7 + $0x18] sm:$0xf]
    %v178 = vld [vmem:[#allocation7 + $0x1c] sm:$0xf]
    %v179 = vld [vmem:[#allocation7 + $0x20] sm:$0xf]
    %v180 = vld [vmem:[#allocation7 + $0x24] sm:$0xf]
    %v181 = vld [vmem:[#allocation7 + $0x28] sm:$0xf]
    %v182 = vld [vmem:[#allocation7 + $0x2c] sm:$0xf]
    %v183 = vld [vmem:[#allocation7 + $0x30] sm:$0xf]
    %v184 = vld [vmem:[#allocation7 + $0x34] sm:$0xf]
    %v185 = vld [vmem:[#allocation7 + $0x38] sm:$0xf]
    %v186 = vld [vmem:[#allocation7 + $0x3c] sm:$0xf]
    %v187 = vlaneseq
    %v188 = vshrl.u32 %v187, 7
    %v189 = vsub.s32 1, %v188
    %v190 = vrot.slane %v59, %v189
    %v207 = vunpack.c.l.b16 %v171
    %v208 = vunpack.c.l.b16 %v172
    %v209 = vunpack.c.l.b16 %v173
    %v210 = vunpack.c.l.b16 %v174
    %v211 = vunpack.c.l.b16 %v175
    %v212 = vunpack.c.l.b16 %v176
    %v213 = vunpack.c.l.b16 %v177
    %v214 = vunpack.c.l.b16 %v178
    %v215 = vunpack.c.l.b16 %v179
    %v216 = vunpack.c.l.b16 %v180
    %v217 = vunpack.c.l.b16 %v181
    %v218 = vunpack.c.l.b16 %v182
    %v219 = vunpack.c.l.b16 %v183
    %v220 = vunpack.c.l.b16 %v184
    %v221 = vunpack.c.l.b16 %v185
    %v222 = vunpack.c.l.b16 %v186
    %v223 = vpack.c.b16 %v208, %v207
    %v224 = vpack.c.b16 %v210, %v209
    %v225 = vpack.c.b16 %v212, %v211
    %v226 = vpack.c.b16 %v214, %v213
    %v227 = vpack.c.b16 %v216, %v215
    %v228 = vpack.c.b16 %v218, %v217
    %v229 = vpack.c.b16 %v220, %v219
    %v230 = vpack.c.b16 %v222, %v221
    %239 = vmatprep.subr.bf16.mxu0 0
    %240 = vmatpush1.bf16.msra.mxu0 %v223
    %241 = vmatprep.subr.bf16.mxu0 0
    %242 = vmatpush1.bf16.msra.mxu0 %v224
    %243 = vmatprep.subr.bf16.mxu0 0
    %244 = vmatpush1.bf16.msra.mxu0 %v225
    %245 = vmatprep.subr.bf16.mxu0 0
    %246 = vmatpush1.bf16.msra.mxu0 %v226
    %247 = vmatprep.subr.bf16.mxu0 0
    %248 = vmatpush1.bf16.msra.mxu0 %v227
    %249 = vmatprep.subr.bf16.mxu0 0
    %250 = vmatpush1.bf16.msra.mxu0 %v228
    %251 = vmatprep.subr.bf16.mxu0 0
    %252 = vmatpush1.bf16.msra.mxu0 %v229
    %253 = vmatprep.subr.bf16.mxu0 0
    %254 = vmatpush1.bf16.msra.mxu0 %v230
    %255 = vmatprep.subr.bf16.mxu0 0
    %256 = vmatpush1.bf16.msra.mxu0 0
    %257 = vmatprep.subr.bf16.mxu0 0
    %258 = vmatpush1.bf16.msra.mxu0 0
    %259 = vmatprep.subr.bf16.mxu0 0
    %260 = vmatpush1.bf16.msra.mxu0 0
    %261 = vmatprep.subr.bf16.mxu0 0
    %262 = vmatpush1.bf16.msra.mxu0 0
    %263 = vmatprep.subr.bf16.mxu0 0
    %264 = vmatpush1.bf16.msra.mxu0 0
    %265 = vmatprep.subr.bf16.mxu0 0
    %266 = vmatpush1.bf16.msra.mxu0 0
    %267 = vmatprep.subr.bf16.mxu0 0
    %268 = vmatpush1.bf16.msra.mxu0 0
    %269 = vmatprep.subr.bf16.mxu0 0
    %270 = vmatpush1.bf16.msra.mxu0 0
    %271 = vmatprep.mubr.bf16.mxu0 0
    %272 = vmatmul.mubr.bf16.gmra.mrb[0].mxu0 %v170
    %v273 = vpop.f32.mrb[0].mxu0
    %v274 = vadd.f32 %v190, %v273
    %v275 = vpop.f32.mrb[0].mxu0
    %v276 = vpop.f32.mrb[0].mxu0
    %v277 = vpop.f32.mrb[0].mxu0
    %278 = vdwg.mxu0
    %v279 = vadd.f32 %v274, %v58
    %v280 = vmax.f32 %v279, 0.0
    %281 = vst [vmem:[#allocation8] sm:$0xff] %v280
    // Predicated region
    $region30: #{tpu_custom_call.1} parent=1 // pred_check
      _
    $region31: #{tpu_custom_call.1} parent=1 // pred_check_branch
      %283 = sbr.rel (0) target = $region33
    $region32: #{tpu_custom_call.1} parent=1 // pred_region
      %s285 = ssub.s32 128, 128
      %286 = vsyncadd [#allocation4], %s285
      %s288 = sshll.u32 [#allocation8], 4
      %s289 = int_to_ptr.vmem [resolvable:$true] %s288
      %291 = dma.vmem_to_hbm [thread:$0]  %s289, 128, %s4, [#allocation4]
    $region33: #{tpu_custom_call.1} parent=1 // pred_fallthru
      _
    // Predicated region
    $region34: #{tpu_custom_call.1} parent=1 // pred_check
      _
    $region35: #{tpu_custom_call.1} parent=1 // pred_check_branch
      %293 = sbr.rel (0) target = $region37
    $region36: #{tpu_custom_call.1} parent=1 // pred_region
      %294 = dma.done [#allocation4], 128
    $region37: #{tpu_custom_call.1} parent=1 // pred_fallthru
      _
    %295 = vsyncpa [#allocation3], 1
    %296 = vsyncpa [#allocation6], 1
    %297 = vsyncpa [#allocation4], 1

</llo_original>
